<compile_context>
chip_gen: v7x
topology: tpu7x:2x2x1
jax: 0.10.0
libtpu: 0.0.40
codegen_flags: <defaults>
</compile_context>

<pallas_src>
import functools
import math

import jax
import jax.numpy as jnp
from jax import lax
from jax.experimental import pallas as pl
from jax.experimental.pallas import tpu as pltpu


_VMEM_LIMIT = 48 * 1024 * 1024  # headroom inside v7x's 64 MiB per-TC VMEM


def _pick_tile(dim, target, align=1):
    """Largest tile <= target that divides `dim` and is a multiple of `align`
    (or the full dim, which is always a legal block extent)."""
    t = min(dim, target)
    if t == dim:
        return t
    for c in range(t, 0, -1):
        if dim % c == 0 and c % align == 0:
            return c
    return dim


# --------------------------------------------------------------------------
# Fused Q/K/V projection for self-attention (shared activation): one tiled
# pallas_call, the x tile is DMA'd ONCE and reused for all three dots.
# --------------------------------------------------------------------------
def _qkv_shared_kernel(x_ref, wq_ref, wk_ref, wv_ref, bq_ref, bk_ref, bv_ref,
                       q_out, k_out, v_out, acc_q, acc_k, acc_v):
    k_i = pl.program_id(2)

    @pl.when(k_i == 0)
    def _init():
        acc_q[...] = jnp.zeros(acc_q.shape, acc_q.dtype)
        acc_k[...] = jnp.zeros(acc_k.shape, acc_k.dtype)
        acc_v[...] = jnp.zeros(acc_v.shape, acc_v.dtype)

    x = x_ref[...]  # bf16, loaded once, reused for all three MXU pushes
    acc_q[...] += jnp.dot(x, wq_ref[...], preferred_element_type=jnp.float32)
    acc_k[...] += jnp.dot(x, wk_ref[...], preferred_element_type=jnp.float32)
    acc_v[...] += jnp.dot(x, wv_ref[...], preferred_element_type=jnp.float32)

    @pl.when(k_i == pl.num_programs(2) - 1)
    def _finalize():
        q_out[...] = (acc_q[...] + bq_ref[...].astype(jnp.float32)).astype(q_out.dtype)
        k_out[...] = (acc_k[...] + bk_ref[...].astype(jnp.float32)).astype(k_out.dtype)
        v_out[...] = (acc_v[...] + bv_ref[...].astype(jnp.float32)).astype(v_out.dtype)


def fused_qkv_projection_shared(x, wq, wk, wv, bq, bk, bv, *,
                                out_dtype=jnp.bfloat16,
                                tm_target=512, tn_target=512, tk_target=512):
    M, K = x.shape
    N = wq.shape[1]
    tm = _pick_tile(M, tm_target, align=16)    # bf16 sublane min-tile is 16
    tn = _pick_tile(N, tn_target, align=128)
    tk = _pick_tile(K, tk_target, align=128)
    grid = (M // tm, N // tn, K // tk)

    x_spec = pl.BlockSpec((tm, tk), lambda i, j, kk: (i, kk))
    w_spec = pl.BlockSpec((tk, tn), lambda i, j, kk: (kk, j))
    b_spec = pl.BlockSpec((1, tn), lambda i, j, kk: (0, j))
    o_spec = pl.BlockSpec((tm, tn), lambda i, j, kk: (i, j))

    out_sds = jax.ShapeDtypeStruct((M, N), out_dtype)
    isz = x.dtype.itemsize
    cost = pl.CostEstimate(
        flops=3 * 2 * M * N * K,
        transcendentals=0,
        bytes_accessed=isz * (M * K + 3 * K * N + 3 * M * N),
    )

    return pl.pallas_call(
        _qkv_shared_kernel,
        out_shape=(out_sds, out_sds, out_sds),
        grid_spec=pltpu.PrefetchScalarGridSpec(
            num_scalar_prefetch=0,
            grid=grid,
            in_specs=[x_spec, w_spec, w_spec, w_spec, b_spec, b_spec, b_spec],
            out_specs=(o_spec, o_spec, o_spec),
            scratch_shapes=[pltpu.VMEM((tm, tn), jnp.float32)] * 3,
        ),
        compiler_params=pltpu.CompilerParams(
            dimension_semantics=("parallel", "parallel", "arbitrary"),
            vmem_limit_bytes=_VMEM_LIMIT,
        ),
        cost_estimate=cost,
    )(x, wq, wk, wv,
      bq.reshape(1, N), bk.reshape(1, N), bv.reshape(1, N))


# --------------------------------------------------------------------------
# Generic tiled linear (output projection w_o; also q/k/v for cross-attention).
# --------------------------------------------------------------------------
def _linear_kernel(x_ref, w_ref, b_ref, o_ref, acc_ref):
    k_i = pl.program_id(2)

    @pl.when(k_i == 0)
    def _init():
        acc_ref[...] = jnp.zeros(acc_ref.shape, acc_ref.dtype)

    acc_ref[...] += jnp.dot(x_ref[...], w_ref[...],
                            preferred_element_type=jnp.float32)

    @pl.when(k_i == pl.num_programs(2) - 1)
    def _finalize():
        o_ref[...] = (acc_ref[...] + b_ref[...].astype(jnp.float32)).astype(o_ref.dtype)


def pallas_linear(x, w, b, *, out_dtype,
                  tm_target=512, tn_target=512, tk_target=512):
    M, K = x.shape
    N = w.shape[1]
    tm = _pick_tile(M, tm_target, align=16)
    tn = _pick_tile(N, tn_target, align=128)
    tk = _pick_tile(K, tk_target, align=128)
    grid = (M // tm, N // tn, K // tk)

    isz = x.dtype.itemsize
    cost = pl.CostEstimate(
        flops=2 * M * N * K,
        transcendentals=0,
        bytes_accessed=isz * (M * K + K * N + M * N),
    )

    return pl.pallas_call(
        _linear_kernel,
        out_shape=jax.ShapeDtypeStruct((M, N), out_dtype),
        grid_spec=pltpu.PrefetchScalarGridSpec(
            num_scalar_prefetch=0,
            grid=grid,
            in_specs=[pl.BlockSpec((tm, tk), lambda i, j, kk: (i, kk)),
                      pl.BlockSpec((tk, tn), lambda i, j, kk: (kk, j)),
                      pl.BlockSpec((1, tn), lambda i, j, kk: (0, j))],
            out_specs=pl.BlockSpec((tm, tn), lambda i, j, kk: (i, j)),
            scratch_shapes=[pltpu.VMEM((tm, tn), jnp.float32)],
        ),
        compiler_params=pltpu.CompilerParams(
            dimension_semantics=("parallel", "parallel", "arbitrary"),
            vmem_limit_bytes=_VMEM_LIMIT,
        ),
        cost_estimate=cost,
    )(x, w, b.reshape(1, N))


# --------------------------------------------------------------------------
# Flash attention.  Grid = (B, H, Sq-blocks, Skv-blocks); each grid step works
# on one head's (tq, d_k) / (tkv, d_k) tiles with online-softmax scratch.
# Variants (selected at trace time): causal (in-kernel iota mask, KV-block
# skipping), explicit additive bias, or no mask.
# --------------------------------------------------------------------------
def _flash_kernel(q_ref, k_ref, v_ref, *rest, causal, has_bias):
    if has_bias:
        bias_ref, o_ref, m_sc, l_sc, acc_sc = rest
    else:
        o_ref, m_sc, l_sc, acc_sc = rest
        bias_ref = None

    q_i = pl.program_id(2)
    kv_i = pl.program_id(3)
    block_q = q_ref.shape[0]
    block_kv = k_ref.shape[0]

    @pl.when(kv_i == 0)
    def _init():
        m_sc[...] = jnp.full(m_sc.shape, -jnp.inf, m_sc.dtype)
        l_sc[...] = jnp.zeros(l_sc.shape, l_sc.dtype)
        acc_sc[...] = jnp.zeros(acc_sc.shape, acc_sc.dtype)

    def _compute():
        # q is pre-scaled by 1/sqrt(d_k) (folded into w_q/b_q on the host).
        q = q_ref[...]                         # (tq, d_k)  bf16
        k = k_ref[...]                         # (tkv, d_k) bf16
        s = lax.dot_general(q, k, (((1,), (1,)), ((), ())),
                            preferred_element_type=jnp.float32)   # (tq, tkv)
        if has_bias:
            s = s + bias_ref[...].astype(jnp.float32)
        if causal:
            q_pos = q_i * block_q + lax.broadcasted_iota(
                jnp.int32, (block_q, block_kv), 0)
            k_pos = kv_i * block_kv + lax.broadcasted_iota(
                jnp.int32, (block_q, block_kv), 1)
            s = jnp.where(q_pos >= k_pos, s, -1e9)   # matches torch masked_fill_

        m_prev = m_sc[...]
        m_new = jnp.maximum(m_prev, jnp.max(s, axis=-1, keepdims=True))
        alpha = jnp.exp(m_prev - m_new)
        p = jnp.exp(s - m_new)                                    # f32 exp
        l_sc[...] = alpha * l_sc[...] + jnp.sum(p, axis=-1, keepdims=True)
        pv = lax.dot_general(p.astype(v_ref.dtype), v_ref[...],
                             (((1,), (0,)), ((), ())),
                             preferred_element_type=jnp.float32)  # (tq, d_k)
        acc_sc[...] = alpha * acc_sc[...] + pv
        m_sc[...] = m_new

    if causal:
        # Skip KV blocks strictly above the diagonal (finalize stays outside).
        @pl.when(kv_i * block_kv <= q_i * block_q + (block_q - 1))
        def _():
            _compute()
    else:
        _compute()

    @pl.when(kv_i == pl.num_programs(3) - 1)
    def _finalize():
        # approx reciprocal (EUP slot) -> ~1e-3 rel error, below bf16 output
        # precision; one lane-dense full-block store.
        inv_l = pl.reciprocal(l_sc[...], approx=True)
        o_ref[...] = (acc_sc[...] * inv_l).astype(o_ref.dtype)


def pallas_flash_mha(qh, kh, vh, bias=None, *, causal=False,
                     block_q=256, block_kv=256, kv_buffers=3):
    """qh/kh/vh: (B, H, S, d_k) bf16 (q pre-scaled); bias: optional additive
    (B, 1, S, S) bf16 mask bias (ignored when causal=True)."""
    B, H, S, Dk = qh.shape
    tq = _pick_tile(S, block_q, align=16)
    tkv = _pick_tile(S, block_kv, align=16)
    grid = (B, H, S // tq, S // tkv)

    kv_pm = pl.Buffered(kv_buffers)   # deeper pipelining on the streamed K/V
    q_spec = pl.BlockSpec((None, None, tq, Dk), lambda b, h, qi, ki: (b, h, qi, 0))
    k_spec = pl.BlockSpec((None, None, tkv, Dk), lambda b, h, qi, ki: (b, h, ki, 0),
                          pipeline_mode=kv_pm)
    v_spec = pl.BlockSpec((None, None, tkv, Dk), lambda b, h, qi, ki: (b, h, ki, 0),
                          pipeline_mode=kv_pm)
    o_spec = pl.BlockSpec((None, None, tq, Dk), lambda b, h, qi, ki: (b, h, qi, 0))

    has_bias = (bias is not None) and (not causal)
    in_specs = [q_spec, k_spec, v_spec]
    args = [qh, kh, vh]
    if has_bias:
        in_specs.append(pl.BlockSpec((None, None, tq, tkv),
                                     lambda b, h, qi, ki: (b, 0, qi, ki)))
        args.append(bias)

    kernel = functools.partial(_flash_kernel, causal=causal, has_bias=has_bias)

    isz = qh.dtype.itemsize
    flops = 4 * B * H * S * S * Dk
    if causal:
        flops //= 2
    bias_bytes = bias.size * bias.dtype.itemsize if has_bias else 0
    cost = pl.CostEstimate(flops=flops, transcendentals=B * H * S * S,
                           bytes_accessed=isz * 4 * B * H * S * Dk + bias_bytes)

    return pl.pallas_call(
        kernel,
        out_shape=jax.ShapeDtypeStruct((B, H, S, Dk), qh.dtype),
        grid_spec=pltpu.PrefetchScalarGridSpec(
            num_scalar_prefetch=0,
            grid=grid,
            in_specs=in_specs,
            out_specs=o_spec,
            scratch_shapes=[
                pltpu.VMEM((tq, 1), jnp.float32),    # running max
                pltpu.VMEM((tq, 1), jnp.float32),    # running sum
                pltpu.VMEM((tq, Dk), jnp.float32),   # output accumulator
            ],
        ),
        compiler_params=pltpu.CompilerParams(
            # 3 parallel axes -> B*H*(S/tq) iterations for megacore sharding
            # (>= 2 on any realistic shape, so both v7x TCs get work).
            dimension_semantics=("parallel", "parallel", "parallel", "arbitrary"),
            vmem_limit_bytes=_VMEM_LIMIT,
        ),
        cost_estimate=cost,
    )(*args)


# ------------------------------ module wrapper -----------------------------
class MultiHeadAttentionBlockPallas:
    def __init__(self, d_model: int, h: int, dropout: float, key, *,
                 block_q: int = 256, block_kv: int = 256):
        assert d_model % h == 0, "d_model is not divisible by h"
        self.d_model = d_model
        self.h = h
        self.d_k = d_model // h
        # TODO(synk): training-mode dropout on attention probabilities is not
        # implemented (module is evaluated in eval mode; dropout is identity).
        self.dropout_p = dropout
        self.block_q = block_q
        self.block_kv = block_kv

        ks = jax.random.split(key, 8)
        bound = 1.0 / math.sqrt(d_model)

        def init_w(kk):  # stored as (in, out) so kernels compute x @ W + b
            return jax.random.uniform(kk, (d_model, d_model), jnp.float32, -bound, bound)

        def init_b(kk):
            return jax.random.uniform(kk, (d_model,), jnp.float32, -bound, bound)

        # f32 master parameters (reference / torch parity).
        self.w_q, self.b_q = init_w(ks[0]), init_b(ks[1])
        self.w_k, self.b_k = init_w(ks[2]), init_b(ks[3])
        self.w_v, self.b_v = init_w(ks[4]), init_b(ks[5])
        self.w_o, self.b_o = init_w(ks[6]), init_b(ks[7])

        # bf16 compute copies; the 1/sqrt(d_k) softmax scale is folded into the
        # q projection (weights scaled once in f32, then cast).
        sm_scale = 1.0 / math.sqrt(self.d_k)
        bf16 = jnp.bfloat16
        self.w_q_c = (self.w_q * sm_scale).astype(bf16)
        self.b_q_c = self.b_q * sm_scale               # biases stay f32 (added post-acc)
        self.w_k_c, self.b_k_c = self.w_k.astype(bf16), self.b_k
        self.w_v_c, self.b_v_c = self.w_v.astype(bf16), self.b_v
        self.w_o_c, self.b_o_c = self.w_o.astype(bf16), self.b_o

    def __call__(self, q, k, v, mask, *, causal=False):
        B, S, D = q.shape
        H, Dk = self.h, self.d_k
        M = B * S
        bf16 = jnp.bfloat16

        xq = q.reshape(M, D).astype(bf16)
        if (q is k) and (k is v):
            # Self-attention: single fused kernel, activation DMA'd once.
            qp, kp, vp = fused_qkv_projection_shared(
                xq, self.w_q_c, self.w_k_c, self.w_v_c,
                self.b_q_c, self.b_k_c, self.b_v_c)
        else:
            xk = k.reshape(M, D).astype(bf16)
            xv = v.reshape(M, D).astype(bf16)
            qp = pallas_linear(xq, self.w_q_c, self.b_q_c, out_dtype=bf16)
            kp = pallas_linear(xk, self.w_k_c, self.b_k_c, out_dtype=bf16)
            vp = pallas_linear(xv, self.w_v_c, self.b_v_c, out_dtype=bf16)

        # Head split: reshape + transpose to (B, H, S, d_k) (one XLA relayout
        # pass on bf16 data); inside the attention kernel H is a grid axis, so
        # there is no in-kernel per-head loop and no strided per-head I/O.
        qh = qp.reshape(B, S, H, Dk).transpose(0, 2, 1, 3)
        kh = kp.reshape(B, S, H, Dk).transpose(0, 2, 1, 3)
        vh = vp.reshape(B, S, H, Dk).transpose(0, 2, 1, 3)

        bias = None
        if (not causal) and (mask is not None):
            # Additive bf16 bias (handles (B,1,S,S) and key-padding (B,1,1,S)).
            mask_b = jnp.broadcast_to(mask, (B, 1, S, S))
            bias = jnp.where(mask_b == 0, -1e9, 0.0).astype(bf16)

        x = pallas_flash_mha(qh, kh, vh, bias=bias, causal=causal,
                             block_q=self.block_q, block_kv=self.block_kv)

        # Merge heads and apply the output projection (f32 output).
        x = x.transpose(0, 2, 1, 3).reshape(M, D)
        out = pallas_linear(x, self.w_o_c, self.b_o_c, out_dtype=jnp.float32)
        return out.reshape(B, S, D)


# ------------------------------ reference (pure JAX, f32) -------------------
def reference_forward(block, q, k, v, mask):
    B, S, D = q.shape
    H, Dk = block.h, block.d_k
    query = q @ block.w_q + block.b_q
    key_p = k @ block.w_k + block.b_k
    value = v @ block.w_v + block.b_v
    qh = query.reshape(B, S, H, Dk).transpose(0, 2, 1, 3)
    kh = key_p.reshape(B, S, H, Dk).transpose(0, 2, 1, 3)
    vh = value.reshape(B, S, H, Dk).transpose(0, 2, 1, 3)
    scores = jnp.einsum("bhqd,bhkd->bhqk", qh, kh) / math.sqrt(Dk)
    if mask is not None:
        scores = jnp.where(mask == 0, -1e9, scores)
    p = jax.nn.softmax(scores, axis=-1)
    x = jnp.einsum("bhqk,bhkd->bhqd", p, vh)
    x = x.transpose(0, 2, 1, 3).reshape(B, S, D)
    return x @ block.w_o + block.b_o


def _check(out, ref, shape, tol=0.15):
    # bf16 operands + bf16 intermediates vs. an f32 reference -> ~1e-2 level
    # deviations; tol still catches any structural (mask/transpose/accum) bug.
    assert out.shape == shape, f"bad shape {out.shape} vs {shape}"
    err = float(jnp.max(jnp.abs(out.astype(jnp.float32) - ref)))
    assert err < tol, f"mismatch vs reference: max_err={err}"


def _causal_mask(B, S):
    return jnp.broadcast_to(
        jnp.tril(jnp.ones((S, S), jnp.int32))[None, None], (B, 1, S, S))


# ----------------------------------- main -----------------------------------
if __name__ == "__main__":
    key = jax.random.PRNGKey(0)
    kp, kx1, kq2, kk2, kv2, kx3 = jax.random.split(key, 6)

    # --- Case 1: self-attention, causal fast path (in-kernel mask, fused QKV).
    B, S, D, H = 2, 8, 32, 4
    block = MultiHeadAttentionBlockPallas(D, H, dropout=0.0, key=kp)
    x = jax.random.normal(kx1, (B, S, D), jnp.float32)
    out1 = jax.block_until_ready(block(x, x, x, mask=None, causal=True))
    _check(out1, reference_forward(block, x, x, x, _causal_mask(B, S)), (B, S, D))

    # --- Case 2: cross-attention with an explicit mask (streamed bf16 bias).
    q2 = jax.random.normal(kq2, (B, S, D), jnp.float32)
    k2 = jax.random.normal(kk2, (B, S, D), jnp.float32)
    v2 = jax.random.normal(kv2, (B, S, D), jnp.float32)
    mask2 = _causal_mask(B, S)
    out2 = jax.block_until_ready(block(q2, k2, v2, mask2))
    _check(out2, reference_forward(block, q2, k2, v2, mask2), (B, S, D))

    # --- Case 2b: mask=None (no bias streamed at all).
    out2b = jax.block_until_ready(block(q2, k2, v2, None))
    _check(out2b, reference_forward(block, q2, k2, v2, None), (B, S, D))

    # --- Case 3: larger causal self-attention with multiple q/kv blocks
    #     (exercises online softmax across blocks and causal block skipping).
    B3, S3, D3, H3 = 1, 256, 64, 4
    block3 = MultiHeadAttentionBlockPallas(D3, H3, dropout=0.0, key=kp,
                                           block_q=128, block_kv=128)
    x3 = jax.random.normal(kx3, (B3, S3, D3), jnp.float32)
    out3 = jax.block_until_ready(block3(x3, x3, x3, mask=None, causal=True))
    _check(out3, reference_forward(block3, x3, x3, x3, _causal_mask(B3, S3)),
           (B3, S3, D3))

    print("KERNEL_OK")
</pallas_src>

<mosaic_0001>
module attributes {stable_mosaic.version = 11 : i64} {
  func.func @_qkv_shared_kernel(%arg0: i32, %arg1: i32, %arg2: i32, %arg3: memref<16x32xbf16, #tpu.memory_space<vmem>>, %arg4: memref<32x32xbf16, #tpu.memory_space<vmem>>, %arg5: memref<32x32xbf16, #tpu.memory_space<vmem>>, %arg6: memref<32x32xbf16, #tpu.memory_space<vmem>>, %arg7: memref<1x32xf32, #tpu.memory_space<vmem>>, %arg8: memref<1x32xf32, #tpu.memory_space<vmem>>, %arg9: memref<1x32xf32, #tpu.memory_space<vmem>>, %arg10: memref<16x32xbf16, #tpu.memory_space<vmem>>, %arg11: memref<16x32xbf16, #tpu.memory_space<vmem>>, %arg12: memref<16x32xbf16, #tpu.memory_space<vmem>>, %arg13: memref<16x32xf32, #tpu.memory_space<vmem>>, %arg14: memref<16x32xf32, #tpu.memory_space<vmem>>, %arg15: memref<16x32xf32, #tpu.memory_space<vmem>>) attributes {dimension_semantics = [#tpu.dimension_semantics<parallel>, #tpu.dimension_semantics<parallel>, #tpu.dimension_semantics<arbitrary>], iteration_bounds = array<i64: 1, 1, 1>, scalar_prefetch = 0 : i64, scratch_operands = 3 : i64, tpu.core_type = #tpu.core_type<tc>, window_params = [{transform_indices = @transform_0, window_bounds = array<i64: 16, 32>}, {transform_indices = @transform_1, window_bounds = array<i64: 32, 32>}, {transform_indices = @transform_2, window_bounds = array<i64: 32, 32>}, {transform_indices = @transform_3, window_bounds = array<i64: 32, 32>}, {transform_indices = @transform_4, window_bounds = array<i64: 1, 32>}, {transform_indices = @transform_5, window_bounds = array<i64: 1, 32>}, {transform_indices = @transform_6, window_bounds = array<i64: 1, 32>}, {transform_indices = @transform_7, window_bounds = array<i64: 16, 32>}, {transform_indices = @transform_8, window_bounds = array<i64: 16, 32>}, {transform_indices = @transform_9, window_bounds = array<i64: 16, 32>}]} {
    %c0_i32 = arith.constant 0 : i32
    %0 = arith.cmpi eq, %arg2, %c0_i32 : i32
    %1 = arith.extui %0 : i1 to i32
    %c0_i32_0 = arith.constant 0 : i32
    %2 = arith.cmpi ne, %1, %c0_i32_0 : i32
    scf.if %2 {
      %cst_24 = arith.constant 0.000000e+00 : f32
      %22 = vector.broadcast %cst_24 : f32 to vector<16x32xf32>
      %c0_25 = arith.constant 0 : index
      %c0_26 = arith.constant 0 : index
      %23 = vector.load %arg13[%c0_25, %c0_26] : memref<16x32xf32, #tpu.memory_space<vmem>>, vector<16x32xf32>
      tpu.vector_store %arg13[%c0_25, %c0_26], %22 {strides = array<i32>} : memref<16x32xf32, #tpu.memory_space<vmem>>, vector<16x32xf32>,
      %cst_27 = arith.constant 0.000000e+00 : f32
      %24 = vector.broadcast %cst_27 : f32 to vector<16x32xf32>
      %c0_28 = arith.constant 0 : index
      %c0_29 = arith.constant 0 : index
      %25 = vector.load %arg14[%c0_28, %c0_29] : memref<16x32xf32, #tpu.memory_space<vmem>>, vector<16x32xf32>
      tpu.vector_store %arg14[%c0_28, %c0_29], %24 {strides = array<i32>} : memref<16x32xf32, #tpu.memory_space<vmem>>, vector<16x32xf32>,
      %cst_30 = arith.constant 0.000000e+00 : f32
      %26 = vector.broadcast %cst_30 : f32 to vector<16x32xf32>
      %c0_31 = arith.constant 0 : index
      %c0_32 = arith.constant 0 : index
      %27 = vector.load %arg15[%c0_31, %c0_32] : memref<16x32xf32, #tpu.memory_space<vmem>>, vector<16x32xf32>
      tpu.vector_store %arg15[%c0_31, %c0_32], %26 {strides = array<i32>} : memref<16x32xf32, #tpu.memory_space<vmem>>, vector<16x32xf32>,
    } else {
    }
    %c0 = arith.constant 0 : index
    %c0_1 = arith.constant 0 : index
    %3 = vector.load %arg3[%c0, %c0_1] : memref<16x32xbf16, #tpu.memory_space<vmem>>, vector<16x32xbf16>
    %c0_2 = arith.constant 0 : index
    %c0_3 = arith.constant 0 : index
    %4 = vector.load %arg13[%c0_2, %c0_3] : memref<16x32xf32, #tpu.memory_space<vmem>>, vector<16x32xf32>
    %c0_4 = arith.constant 0 : index
    %c0_5 = arith.constant 0 : index
    %5 = vector.load %arg4[%c0_4, %c0_5] : memref<32x32xbf16, #tpu.memory_space<vmem>>, vector<32x32xbf16>
    %cst = arith.constant dense<0.000000e+00> : vector<16x32xf32>
    %6 = tpu.matmul %3, %5, %cst {dimension_numbers = #tpu.dot_dimension_numbers<[1], [0], [0], [1], [0, 0, 1, 1], [], []>} : vector<16x32xbf16>, vector<32x32xbf16>, vector<16x32xf32> -> vector<16x32xf32>
    %7 = arith.addf %4, %6 : vector<16x32xf32>
    %c0_6 = arith.constant 0 : index
    %c0_7 = arith.constant 0 : index
    %8 = vector.load %arg13[%c0_6, %c0_7] : memref<16x32xf32, #tpu.memory_space<vmem>>, vector<16x32xf32>
    tpu.vector_store %arg13[%c0_6, %c0_7], %7 {strides = array<i32>} : memref<16x32xf32, #tpu.memory_space<vmem>>, vector<16x32xf32>,
    %c0_8 = arith.constant 0 : index
    %c0_9 = arith.constant 0 : index
    %9 = vector.load %arg14[%c0_8, %c0_9] : memref<16x32xf32, #tpu.memory_space<vmem>>, vector<16x32xf32>
    %c0_10 = arith.constant 0 : index
    %c0_11 = arith.constant 0 : index
    %10 = vector.load %arg5[%c0_10, %c0_11] : memref<32x32xbf16, #tpu.memory_space<vmem>>, vector<32x32xbf16>
    %cst_12 = arith.constant dense<0.000000e+00> : vector<16x32xf32>
    %11 = tpu.matmul %3, %10, %cst_12 {dimension_numbers = #tpu.dot_dimension_numbers<[1], [0], [0], [1], [0, 0, 1, 1], [], []>} : vector<16x32xbf16>, vector<32x32xbf16>, vector<16x32xf32> -> vector<16x32xf32>
    %12 = arith.addf %9, %11 : vector<16x32xf32>
    %c0_13 = arith.constant 0 : index
    %c0_14 = arith.constant 0 : index
    %13 = vector.load %arg14[%c0_13, %c0_14] : memref<16x32xf32, #tpu.memory_space<vmem>>, vector<16x32xf32>
    tpu.vector_store %arg14[%c0_13, %c0_14], %12 {strides = array<i32>} : memref<16x32xf32, #tpu.memory_space<vmem>>, vector<16x32xf32>,
    %c0_15 = arith.constant 0 : index
    %c0_16 = arith.constant 0 : index
    %14 = vector.load %arg15[%c0_15, %c0_16] : memref<16x32xf32, #tpu.memory_space<vmem>>, vector<16x32xf32>
    %c0_17 = arith.constant 0 : index
    %c0_18 = arith.constant 0 : index
    %15 = vector.load %arg6[%c0_17, %c0_18] : memref<32x32xbf16, #tpu.memory_space<vmem>>, vector<32x32xbf16>
    %cst_19 = arith.constant dense<0.000000e+00> : vector<16x32xf32>
    %16 = tpu.matmul %3, %15, %cst_19 {dimension_numbers = #tpu.dot_dimension_numbers<[1], [0], [0], [1], [0, 0, 1, 1], [], []>} : vector<16x32xbf16>, vector<32x32xbf16>, vector<16x32xf32> -> vector<16x32xf32>
    %17 = arith.addf %14, %16 : vector<16x32xf32>
    %c0_20 = arith.constant 0 : index
    %c0_21 = arith.constant 0 : index
    %18 = vector.load %arg15[%c0_20, %c0_21] : memref<16x32xf32, #tpu.memory_space<vmem>>, vector<16x32xf32>
    tpu.vector_store %arg15[%c0_20, %c0_21], %17 {strides = array<i32>} : memref<16x32xf32, #tpu.memory_space<vmem>>, vector<16x32xf32>,
    %c0_i32_22 = arith.constant 0 : i32
    %19 = arith.cmpi eq, %arg2, %c0_i32_22 : i32
    %20 = arith.extui %19 : i1 to i32
    %c0_i32_23 = arith.constant 0 : i32
    %21 = arith.cmpi ne, %20, %c0_i32_23 : i32
    scf.if %21 {
      %c0_24 = arith.constant 0 : index
      %c0_25 = arith.constant 0 : index
      %22 = vector.load %arg13[%c0_24, %c0_25] : memref<16x32xf32, #tpu.memory_space<vmem>>, vector<16x32xf32>
      %c0_26 = arith.constant 0 : index
      %c0_27 = arith.constant 0 : index
      %23 = vector.load %arg7[%c0_26, %c0_27] : memref<1x32xf32, #tpu.memory_space<vmem>>, vector<1x32xf32>
      %24 = vector.broadcast %23 : vector<1x32xf32> to vector<16x32xf32>
      %25 = arith.addf %22, %24 : vector<16x32xf32>
      %26 = arith.truncf %25 : vector<16x32xf32> to vector<16x32xbf16>
      %c0_28 = arith.constant 0 : index
      %c0_29 = arith.constant 0 : index
      %27 = vector.load %arg10[%c0_28, %c0_29] : memref<16x32xbf16, #tpu.memory_space<vmem>>, vector<16x32xbf16>
      tpu.vector_store %arg10[%c0_28, %c0_29], %26 {strides = array<i32>} : memref<16x32xbf16, #tpu.memory_space<vmem>>, vector<16x32xbf16>,
      %c0_30 = arith.constant 0 : index
      %c0_31 = arith.constant 0 : index
      %28 = vector.load %arg14[%c0_30, %c0_31] : memref<16x32xf32, #tpu.memory_space<vmem>>, vector<16x32xf32>
      %c0_32 = arith.constant 0 : index
      %c0_33 = arith.constant 0 : index
      %29 = vector.load %arg8[%c0_32, %c0_33] : memref<1x32xf32, #tpu.memory_space<vmem>>, vector<1x32xf32>
      %30 = vector.broadcast %29 : vector<1x32xf32> to vector<16x32xf32>
      %31 = arith.addf %28, %30 : vector<16x32xf32>
      %32 = arith.truncf %31 : vector<16x32xf32> to vector<16x32xbf16>
      %c0_34 = arith.constant 0 : index
      %c0_35 = arith.constant 0 : index
      %33 = vector.load %arg11[%c0_34, %c0_35] : memref<16x32xbf16, #tpu.memory_space<vmem>>, vector<16x32xbf16>
      tpu.vector_store %arg11[%c0_34, %c0_35], %32 {strides = array<i32>} : memref<16x32xbf16, #tpu.memory_space<vmem>>, vector<16x32xbf16>,
      %c0_36 = arith.constant 0 : index
      %c0_37 = arith.constant 0 : index
      %34 = vector.load %arg15[%c0_36, %c0_37] : memref<16x32xf32, #tpu.memory_space<vmem>>, vector<16x32xf32>
      %c0_38 = arith.constant 0 : index
      %c0_39 = arith.constant 0 : index
      %35 = vector.load %arg9[%c0_38, %c0_39] : memref<1x32xf32, #tpu.memory_space<vmem>>, vector<1x32xf32>
      %36 = vector.broadcast %35 : vector<1x32xf32> to vector<16x32xf32>
      %37 = arith.addf %34, %36 : vector<16x32xf32>
      %38 = arith.truncf %37 : vector<16x32xf32> to vector<16x32xbf16>
      %c0_40 = arith.constant 0 : index
      %c0_41 = arith.constant 0 : index
      %39 = vector.load %arg12[%c0_40, %c0_41] : memref<16x32xbf16, #tpu.memory_space<vmem>>, vector<16x32xbf16>
      tpu.vector_store %arg12[%c0_40, %c0_41], %38 {strides = array<i32>} : memref<16x32xbf16, #tpu.memory_space<vmem>>, vector<16x32xbf16>,
    } else {
    }
    return
  }
  func.func @transform_0(%arg0: i32, %arg1: i32, %arg2: i32) -> (i32, i32) {
    %c0_i32 = arith.constant 0 : i32
    return %arg0, %arg2 : i32, i32
  }
  func.func @transform_1(%arg0: i32, %arg1: i32, %arg2: i32) -> (i32, i32) {
    %c0_i32 = arith.constant 0 : i32
    return %arg2, %arg1 : i32, i32
  }
  func.func @transform_2(%arg0: i32, %arg1: i32, %arg2: i32) -> (i32, i32) {
    %c0_i32 = arith.constant 0 : i32
    return %arg2, %arg1 : i32, i32
  }
  func.func @transform_3(%arg0: i32, %arg1: i32, %arg2: i32) -> (i32, i32) {
    %c0_i32 = arith.constant 0 : i32
    return %arg2, %arg1 : i32, i32
  }
  func.func @transform_4(%arg0: i32, %arg1: i32, %arg2: i32) -> (i32, i32) {
    %c0_i32 = arith.constant 0 : i32
    %c0_i32_0 = arith.constant 0 : i32
    return %c0_i32, %arg1 : i32, i32
  }
  func.func @transform_5(%arg0: i32, %arg1: i32, %arg2: i32) -> (i32, i32) {
    %c0_i32 = arith.constant 0 : i32
    %c0_i32_0 = arith.constant 0 : i32
    return %c0_i32, %arg1 : i32, i32
  }
  func.func @transform_6(%arg0: i32, %arg1: i32, %arg2: i32) -> (i32, i32) {
    %c0_i32 = arith.constant 0 : i32
    %c0_i32_0 = arith.constant 0 : i32
    return %c0_i32, %arg1 : i32, i32
  }
  func.func @transform_7(%arg0: i32, %arg1: i32, %arg2: i32) -> (i32, i32) {
    %c0_i32 = arith.constant 0 : i32
    return %arg0, %arg1 : i32, i32
  }
  func.func @transform_8(%arg0: i32, %arg1: i32, %arg2: i32) -> (i32, i32) {
    %c0_i32 = arith.constant 0 : i32
    return %arg0, %arg1 : i32, i32
  }
  func.func @transform_9(%arg0: i32, %arg1: i32, %arg2: i32) -> (i32, i32) {
    %c0_i32 = arith.constant 0 : i32
    return %arg0, %arg1 : i32, i32
  }
}

</mosaic_0001>

<llo_original>
// kernel: tpu_custom_call.1
$region0: #{tpu_custom_call.1}
  #allocation0 [shape = 'u32[]', space=smem, size = 0x4, offset = 0x4, fixed_abs, tag = 'smem constant byte address 0x4 - core index']
  #allocation1 [shape = 'u32[144,128]{1,0:T(1,128)}', space=vmem, size = 0x12000, scoped, tag = 'internal scratch']
  #allocation2 [shape = 'f32[16,32]{1,0:T(8,128)}', space=vmem, size = 0x2000, scoped, tag = 'scratch operand']
  #allocation3 [shape = 'f32[16,32]{1,0:T(8,128)}', space=vmem, size = 0x2000, scoped, tag = 'scratch operand']
  #allocation4 [shape = 'f32[16,32]{1,0:T(8,128)}', space=vmem, size = 0x2000, scoped, tag = 'scratch operand']
  %s0 = inlined_call_operand.hbm [shape: bf16[16,32], index: 0, kind: input, shape index: {}]
  %s1 = inlined_call_operand.hbm [shape: bf16[32,32], index: 1, kind: input, shape index: {}]
  %s2 = inlined_call_operand.hbm [shape: bf16[32,32], index: 2, kind: input, shape index: {}]
  %s3 = inlined_call_operand.hbm [shape: bf16[32,32], index: 3, kind: input, shape index: {}]
  %s4 = inlined_call_operand.vmem [shape: f32[1,32], index: 4, kind: input, shape index: {}]
  %s5 = inlined_call_operand.vmem [shape: f32[1,32], index: 5, kind: input, shape index: {}]
  %s6 = inlined_call_operand.vmem [shape: f32[1,32], index: 6, kind: input, shape index: {}]
  %s7 = inlined_call_operand.hbm [shape: bf16[16,32], index: 7, kind: output, shape index: {0}]
  %s8 = inlined_call_operand.hbm [shape: bf16[16,32], index: 8, kind: output, shape index: {1}]
  %s9 = inlined_call_operand.hbm [shape: bf16[16,32], index: 9, kind: output, shape index: {2}]
  %10 = xla_tuple %s7, %s8, %s9
  %s11 = sld [smem:[#allocation0]]
  $region78: #{tpu_custom_call.1} parent=0
    _
  %s13 = ssub.s32 1, %s11
  %s14 = scalar_select 0, %s13, %s11
  $region1: #{tpu_custom_call.1} parent=0
    #allocation5 [shape = 'u8[4096]{0}', space=vmem, size = 0x1000, scoped, tag = 'input window, operand 0, single buffered']
    #allocation6 [shape = 's32[1]{0}', space=sflag, size = 0x4, scoped, tag = 'scoped memory for tpu_custom_call.1']
    #allocation7 [shape = 's32[1]{0}', space=sflag, size = 0x4, scoped, tag = 'scoped memory for tpu_custom_call.1']
    #allocation8 [shape = 'u8[8192]{0}', space=vmem, size = 0x2000, scoped, tag = 'input window, operand 1, single buffered']
    #allocation9 [shape = 's32[1]{0}', space=sflag, size = 0x4, scoped, tag = 'scoped memory for tpu_custom_call.1']
    #allocation10 [shape = 'u8[8192]{0}', space=vmem, size = 0x2000, scoped, tag = 'input window, operand 2, single buffered']
    #allocation11 [shape = 'u8[8192]{0}', space=vmem, size = 0x2000, scoped, tag = 'input window, operand 3, single buffered']
    #allocation12 [shape = 's32[1]{0}', space=sflag, size = 0x4, scoped, tag = 'scoped memory for tpu_custom_call.1']
    #allocation13 [shape = 'u8[4096]{0}', space=vmem, size = 0x1000, scoped, tag = 'output window, operand 0, single buffered']
    #allocation14 [shape = 'u8[4096]{0}', space=vmem, size = 0x1000, scoped, tag = 'output window, operand 1, single buffered']
    #allocation15 [shape = 's32[1]{0}', space=sflag, size = 0x4, scoped, tag = 'scoped memory for tpu_custom_call.1']
    #allocation16 [shape = 'u8[4096]{0}', space=vmem, size = 0x1000, scoped, tag = 'output window, operand 2, single buffered']
    %15 = vsyncpa [#allocation6], 0
    %16 = vsyncpa [#allocation9], 0
    %17 = vsyncpa [#allocation12], 0
    %18 = vsyncpa [#allocation7], 0
    %19 = vsyncpa [#allocation15], 0
    // Predicated region
    $region2: #{tpu_custom_call.1} parent=1 // pred_check
      _
    $region3: #{tpu_custom_call.1} parent=1 // pred_check_branch
      %21 = sbr.rel (0) target = $region5
    $region4: #{tpu_custom_call.1} parent=1 // pred_region
      %s23 = ssub.s32 128, 128
      %24 = vsyncadd [#allocation6], %s23
      %s25 = sshll.u32 [#allocation5], 4
      %s26 = int_to_ptr.vmem [resolvable:$true] %s25
      %31 = dma.hbm_to_vmem [thread:$0]  %s0, 128, %s26, [#allocation6], 64, 64, 4
    $region5: #{tpu_custom_call.1} parent=1 // pred_fallthru
      _
    // Predicated region
    $region6: #{tpu_custom_call.1} parent=1 // pred_check
      _
    $region7: #{tpu_custom_call.1} parent=1 // pred_check_branch
      %33 = sbr.rel (0) target = $region9
    $region8: #{tpu_custom_call.1} parent=1 // pred_region
      %s35 = ssub.s32 256, 256
      %36 = vsyncadd [#allocation9], %s35
      %s37 = sshll.u32 [#allocation8], 4
      %s38 = int_to_ptr.vmem [resolvable:$true] %s37
      %43 = dma.hbm_to_vmem [thread:$0]  %s1, 256, %s38, [#allocation9], 64, 64, 4
    $region9: #{tpu_custom_call.1} parent=1 // pred_fallthru
      _
    // Predicated region
    $region10: #{tpu_custom_call.1} parent=1 // pred_check
      _
    $region11: #{tpu_custom_call.1} parent=1 // pred_check_branch
      %45 = sbr.rel (0) target = $region13
    $region12: #{tpu_custom_call.1} parent=1 // pred_region
      %s47 = ssub.s32 256, 256
      %48 = vsyncadd [#allocation9], %s47
      %s49 = sshll.u32 [#allocation10], 4
      %s50 = int_to_ptr.vmem [resolvable:$true] %s49
      %55 = dma.hbm_to_vmem [thread:$0]  %s2, 256, %s50, [#allocation9], 64, 64, 4
    $region13: #{tpu_custom_call.1} parent=1 // pred_fallthru
      _
    // Predicated region
    $region14: #{tpu_custom_call.1} parent=1 // pred_check
      _
    $region15: #{tpu_custom_call.1} parent=1 // pred_check_branch
      %57 = sbr.rel (0) target = $region17
    $region16: #{tpu_custom_call.1} parent=1 // pred_region
      %s59 = ssub.s32 256, 256
      %60 = vsyncadd [#allocation12], %s59
      %s61 = sshll.u32 [#allocation11], 4
      %s62 = int_to_ptr.vmem [resolvable:$true] %s61
      %67 = dma.hbm_to_vmem [thread:$0]  %s3, 256, %s62, [#allocation12], 64, 64, 4
    $region17: #{tpu_custom_call.1} parent=1 // pred_fallthru
      _
    // Predicated region
    $region18: #{tpu_custom_call.1} parent=1 // pred_check
      _
    $region19: #{tpu_custom_call.1} parent=1 // pred_check_branch
      %69 = sbr.rel (0) target = $region21
    $region20: #{tpu_custom_call.1} parent=1 // pred_region
      _
    $region21: #{tpu_custom_call.1} parent=1 // pred_fallthru
      _
    // Predicated region
    $region22: #{tpu_custom_call.1} parent=1 // pred_check
      _
    $region23: #{tpu_custom_call.1} parent=1 // pred_check_branch
      %71 = sbr.rel (0) target = $region25
    $region24: #{tpu_custom_call.1} parent=1 // pred_region
      _
    $region25: #{tpu_custom_call.1} parent=1 // pred_fallthru
      _
    // Predicated region
    $region26: #{tpu_custom_call.1} parent=1 // pred_check
      _
    $region27: #{tpu_custom_call.1} parent=1 // pred_check_branch
      %73 = sbr.rel (0) target = $region29
    $region28: #{tpu_custom_call.1} parent=1 // pred_region
      _
    $region29: #{tpu_custom_call.1} parent=1 // pred_fallthru
      _
    // Predicated region
    $region30: #{tpu_custom_call.1} parent=1 // pred_check
      _
    $region31: #{tpu_custom_call.1} parent=1 // pred_check_branch
      %75 = sbr.rel (0) target = $region33
    $region32: #{tpu_custom_call.1} parent=1 // pred_region
      %76 = dma.done [#allocation6], 128
    $region33: #{tpu_custom_call.1} parent=1 // pred_fallthru
      _
    // Predicated region
    $region34: #{tpu_custom_call.1} parent=1 // pred_check
      _
    $region35: #{tpu_custom_call.1} parent=1 // pred_check_branch
      %78 = sbr.rel (0) target = $region37
    $region36: #{tpu_custom_call.1} parent=1 // pred_region
      %79 = dma.done [#allocation9], 256
    $region37: #{tpu_custom_call.1} parent=1 // pred_fallthru
      _
    // Predicated region
    $region38: #{tpu_custom_call.1} parent=1 // pred_check
      _
    $region39: #{tpu_custom_call.1} parent=1 // pred_check_branch
      %81 = sbr.rel (0) target = $region41
    $region40: #{tpu_custom_call.1} parent=1 // pred_region
      %82 = dma.done [#allocation9], 256
    $region41: #{tpu_custom_call.1} parent=1 // pred_fallthru
      _
    // Predicated region
    $region42: #{tpu_custom_call.1} parent=1 // pred_check
      _
    $region43: #{tpu_custom_call.1} parent=1 // pred_check_branch
      %84 = sbr.rel (0) target = $region45
    $region44: #{tpu_custom_call.1} parent=1 // pred_region
      %85 = dma.done [#allocation12], 256
    $region45: #{tpu_custom_call.1} parent=1 // pred_fallthru
      _
    %p87 = scmp.eq.s32.totalorder 0, 0
    // Predicated region
    $region46: #{tpu_custom_call.1} parent=1 // pred_check
      %p88 = pneg %p87
    $region47: #{tpu_custom_call.1} parent=1 // pred_check_branch
      %90 = sbr.rel (%p88) target = $region49
    $region48: #{tpu_custom_call.1} parent=1 // pred_region
      %vm91 = vcmask 261120
      %92 = vst.msk [vmem:[#allocation2] sm:$0xff] %vm91, 0.0
      %93 = vst.msk [vmem:[#allocation2 + $0x8] sm:$0xff] %vm91, 0.0
      %94 = vst.msk [vmem:[#allocation3] sm:$0xff] %vm91, 0.0
      %95 = vst.msk [vmem:[#allocation3 + $0x8] sm:$0xff] %vm91, 0.0
      %96 = vst.msk [vmem:[#allocation4] sm:$0xff] %vm91, 0.0
      %97 = vst.msk [vmem:[#allocation4 + $0x8] sm:$0xff] %vm91, 0.0
    $region49: #{tpu_custom_call.1} parent=1 // pred_fallthru
      _
    %v98 = vld [vmem:[#allocation5] sm:$0xf]
    %v99 = vld [vmem:[#allocation5 + $0x4] sm:$0xf]
    %v100 = vld [vmem:[#allocation2] sm:$0xff]
    %v101 = vld [vmem:[#allocation2 + $0x8] sm:$0xff]
    %v102 = vld [vmem:[#allocation8] sm:$0xf]
    %v103 = vld [vmem:[#allocation8 + $0x4] sm:$0xf]
    %v104 = vld [vmem:[#allocation8 + $0x8] sm:$0xf]
    %v105 = vld [vmem:[#allocation8 + $0xc] sm:$0xf]
    %v108 = vunpack.c.l.b16 %v98
    %v109 = vunpack.c.l.b16 %v99
    %v110 = vpack.c.b16 %v109, %v108
    %v115 = vunpack.c.l.b16 %v102
    %v116 = vunpack.c.l.b16 %v103
    %v117 = vunpack.c.l.b16 %v104
    %v118 = vunpack.c.l.b16 %v105
    %v119 = vpack.c.b16 %v116, %v115
    %v120 = vpack.c.b16 %v118, %v117
    %vm123 = vcmask 261120
    %v125 = vsel %vm123, %v110, 0
    %127 = vmatprep.subr.bf16.mxu0 0
    %128 = vmatpush1.bf16.msra.mxu0 %v119
    %129 = vmatprep.subr.bf16.mxu0 0
    %130 = vmatpush1.bf16.msra.mxu0 %v120
    %131 = vmatprep.subr.bf16.mxu0 0
    %132 = vmatpush1.bf16.msra.mxu0 0
    %133 = vmatprep.subr.bf16.mxu0 0
    %134 = vmatpush1.bf16.msra.mxu0 0
    %135 = vmatprep.subr.bf16.mxu0 0
    %136 = vmatpush1.bf16.msra.mxu0 0
    %137 = vmatprep.subr.bf16.mxu0 0
    %138 = vmatpush1.bf16.msra.mxu0 0
    %139 = vmatprep.subr.bf16.mxu0 0
    %140 = vmatpush1.bf16.msra.mxu0 0
    %141 = vmatprep.subr.bf16.mxu0 0
    %142 = vmatpush1.bf16.msra.mxu0 0
    %143 = vmatprep.subr.bf16.mxu0 0
    %144 = vmatpush1.bf16.msra.mxu0 0
    %145 = vmatprep.subr.bf16.mxu0 0
    %146 = vmatpush1.bf16.msra.mxu0 0
    %147 = vmatprep.subr.bf16.mxu0 0
    %148 = vmatpush1.bf16.msra.mxu0 0
    %149 = vmatprep.subr.bf16.mxu0 0
    %150 = vmatpush1.bf16.msra.mxu0 0
    %151 = vmatprep.subr.bf16.mxu0 0
    %152 = vmatpush1.bf16.msra.mxu0 0
    %153 = vmatprep.subr.bf16.mxu0 0
    %154 = vmatpush1.bf16.msra.mxu0 0
    %155 = vmatprep.subr.bf16.mxu0 0
    %156 = vmatpush1.bf16.msra.mxu0 0
    %157 = vmatprep.subr.bf16.mxu0 0
    %158 = vmatpush1.bf16.msra.mxu0 0
    %159 = vmatprep.mubr.bf16.mxu0 0
    %160 = vmatmul.mubr.bf16.gmra.mrb[0].mxu0 %v125
    %v161 = vpop.f32.mrb[0].mxu0
    %v162 = vadd.f32 0.0, %v161
    %v163 = vpop.f32.mrb[0].mxu0
    %v164 = vpop.f32.mrb[0].mxu0
    %v165 = vadd.f32 0.0, %v164
    %v166 = vpop.f32.mrb[0].mxu0
    %167 = vdwg.mxu0
    %v168 = vadd.f32 %v100, %v162
    %v169 = vadd.f32 %v101, %v165
    %170 = vst.msk [vmem:[#allocation2] sm:$0xff] %vm123, %v168
    %171 = vst.msk [vmem:[#allocation2 + $0x8] sm:$0xff] %vm123, %v169
    %v172 = vld [vmem:[#allocation3] sm:$0xff]
    %v173 = vld [vmem:[#allocation3 + $0x8] sm:$0xff]
    %v174 = vld [vmem:[#allocation10] sm:$0xf]
    %v175 = vld [vmem:[#allocation10 + $0x4] sm:$0xf]
    %v176 = vld [vmem:[#allocation10 + $0x8] sm:$0xf]
    %v177 = vld [vmem:[#allocation10 + $0xc] sm:$0xf]
    %v182 = vunpack.c.l.b16 %v174
    %v183 = vunpack.c.l.b16 %v175
    %v184 = vunpack.c.l.b16 %v176
    %v185 = vunpack.c.l.b16 %v177
    %v186 = vpack.c.b16 %v183, %v182
    %v187 = vpack.c.b16 %v185, %v184
    %190 = vmatprep.subr.bf16.mxu0 0
    %191 = vmatpush1.bf16.msra.mxu0 %v186
    %192 = vmatprep.subr.bf16.mxu0 0
    %193 = vmatpush1.bf16.msra.mxu0 %v187
    %194 = vmatprep.subr.bf16.mxu0 0
    %195 = vmatpush1.bf16.msra.mxu0 0
    %196 = vmatprep.subr.bf16.mxu0 0
    %197 = vmatpush1.bf16.msra.mxu0 0
    %198 = vmatprep.subr.bf16.mxu0 0
    %199 = vmatpush1.bf16.msra.mxu0 0
    %200 = vmatprep.subr.bf16.mxu0 0
    %201 = vmatpush1.bf16.msra.mxu0 0
    %202 = vmatprep.subr.bf16.mxu0 0
    %203 = vmatpush1.bf16.msra.mxu0 0
    %204 = vmatprep.subr.bf16.mxu0 0
    %205 = vmatpush1.bf16.msra.mxu0 0
    %206 = vmatprep.subr.bf16.mxu0 0
    %207 = vmatpush1.bf16.msra.mxu0 0
    %208 = vmatprep.subr.bf16.mxu0 0
    %209 = vmatpush1.bf16.msra.mxu0 0
    %210 = vmatprep.subr.bf16.mxu0 0
    %211 = vmatpush1.bf16.msra.mxu0 0
    %212 = vmatprep.subr.bf16.mxu0 0
    %213 = vmatpush1.bf16.msra.mxu0 0
    %214 = vmatprep.subr.bf16.mxu0 0
    %215 = vmatpush1.bf16.msra.mxu0 0
    %216 = vmatprep.subr.bf16.mxu0 0
    %217 = vmatpush1.bf16.msra.mxu0 0
    %218 = vmatprep.subr.bf16.mxu0 0
    %219 = vmatpush1.bf16.msra.mxu0 0
    %220 = vmatprep.subr.bf16.mxu0 0
    %221 = vmatpush1.bf16.msra.mxu0 0
    %222 = vmatprep.mubr.bf16.mxu0 0
    %223 = vmatmul.mubr.bf16.gmra.mrb[0].mxu0 %v125
    %v224 = vpop.f32.mrb[0].mxu0
    %v225 = vadd.f32 0.0, %v224
    %v226 = vpop.f32.mrb[0].mxu0
    %v227 = vpop.f32.mrb[0].mxu0
    %v228 = vadd.f32 0.0, %v227
    %v229 = vpop.f32.mrb[0].mxu0
    %230 = vdwg.mxu0
    %v231 = vadd.f32 %v172, %v225
    %v232 = vadd.f32 %v173, %v228
    %233 = vst.msk [vmem:[#allocation3] sm:$0xff] %vm123, %v231
    %234 = vst.msk [vmem:[#allocation3 + $0x8] sm:$0xff] %vm123, %v232
    %v235 = vld [vmem:[#allocation4] sm:$0xff]
    %v236 = vld [vmem:[#allocation4 + $0x8] sm:$0xff]
    %v237 = vld [vmem:[#allocation11] sm:$0xf]
    %v238 = vld [vmem:[#allocation11 + $0x4] sm:$0xf]
    %v239 = vld [vmem:[#allocation11 + $0x8] sm:$0xf]
    %v240 = vld [vmem:[#allocation11 + $0xc] sm:$0xf]
    %v245 = vunpack.c.l.b16 %v237
    %v246 = vunpack.c.l.b16 %v238
    %v247 = vunpack.c.l.b16 %v239
    %v248 = vunpack.c.l.b16 %v240
    %v249 = vpack.c.b16 %v246, %v245
    %v250 = vpack.c.b16 %v248, %v247
    %253 = vmatprep.subr.bf16.mxu0 0
    %254 = vmatpush1.bf16.msra.mxu0 %v249
    %255 = vmatprep.subr.bf16.mxu0 0
    %256 = vmatpush1.bf16.msra.mxu0 %v250
    %257 = vmatprep.subr.bf16.mxu0 0
    %258 = vmatpush1.bf16.msra.mxu0 0
    %259 = vmatprep.subr.bf16.mxu0 0
    %260 = vmatpush1.bf16.msra.mxu0 0
    %261 = vmatprep.subr.bf16.mxu0 0
    %262 = vmatpush1.bf16.msra.mxu0 0
    %263 = vmatprep.subr.bf16.mxu0 0
    %264 = vmatpush1.bf16.msra.mxu0 0
    %265 = vmatprep.subr.bf16.mxu0 0
    %266 = vmatpush1.bf16.msra.mxu0 0
    %267 = vmatprep.subr.bf16.mxu0 0
    %268 = vmatpush1.bf16.msra.mxu0 0
    %269 = vmatprep.subr.bf16.mxu0 0
    %270 = vmatpush1.bf16.msra.mxu0 0
    %271 = vmatprep.subr.bf16.mxu0 0
    %272 = vmatpush1.bf16.msra.mxu0 0
    %273 = vmatprep.subr.bf16.mxu0 0
    %274 = vmatpush1.bf16.msra.mxu0 0
    %275 = vmatprep.subr.bf16.mxu0 0
    %276 = vmatpush1.bf16.msra.mxu0 0
    %277 = vmatprep.subr.bf16.mxu0 0
    %278 = vmatpush1.bf16.msra.mxu0 0
    %279 = vmatprep.subr.bf16.mxu0 0
    %280 = vmatpush1.bf16.msra.mxu0 0
    %281 = vmatprep.subr.bf16.mxu0 0
    %282 = vmatpush1.bf16.msra.mxu0 0
    %283 = vmatprep.subr.bf16.mxu0 0
    %284 = vmatpush1.bf16.msra.mxu0 0
    %285 = vmatprep.mubr.bf16.mxu0 0
    %286 = vmatmul.mubr.bf16.gmra.mrb[0].mxu0 %v125
    %v287 = vpop.f32.mrb[0].mxu0
    %v288 = vadd.f32 0.0, %v287
    %v289 = vpop.f32.mrb[0].mxu0
    %v290 = vpop.f32.mrb[0].mxu0
    %v291 = vadd.f32 0.0, %v290
    %v292 = vpop.f32.mrb[0].mxu0
    %293 = vdwg.mxu0
    %v294 = vadd.f32 %v235, %v288
    %v295 = vadd.f32 %v236, %v291
    %296 = vst.msk [vmem:[#allocation4] sm:$0xff] %vm123, %v294
    %297 = vst.msk [vmem:[#allocation4 + $0x8] sm:$0xff] %vm123, %v295
    // Predicated region
    $region50: #{tpu_custom_call.1} parent=1 // pred_check
      %p298 = pneg %p87
    $region51: #{tpu_custom_call.1} parent=1 // pred_check_branch
      %300 = sbr.rel (%p298) target = $region53
    $region52: #{tpu_custom_call.1} parent=1 // pred_region
      %v301 = vld [vmem:[#allocation2] sm:$0xff]
      %v302 = vld [vmem:[#allocation2 + $0x8] sm:$0xff]
      %v303 = vld [vmem:[%s4] sm:$0x1]
      %v305 = vlaneseq
      %v306 = vshrl.u32 %v305, 7
      %v307 = vsub.s32 0, %v306
      %v308 = vrot.slane %v303, %v307
      %v310 = vadd.f32 %v301, %v308
      %v311 = vadd.f32 %v302, %v308
      %v312 = vpack.c.bf16 %v311, %v310
      %v314 = vunpack.c.l.b16 %v312
      %v315 = vunpack.c.h.b16 %v312
      %v316 = vpack.c.b16 %v314, %v314
      %v317 = vpack.c.b16 %v315, %v315
      %vm320 = vcmask 257024
      %321 = vst.msk [vmem:[#allocation13] sm:$0xf] %vm320, %v316
      %322 = vst.msk [vmem:[#allocation13 + $0x4] sm:$0xf] %vm320, %v317
      %v323 = vld [vmem:[#allocation3] sm:$0xff]
      %v324 = vld [vmem:[#allocation3 + $0x8] sm:$0xff]
      %v325 = vld [vmem:[%s5] sm:$0x1]
      %v327 = vlaneseq
      %v328 = vshrl.u32 %v327, 7
      %v329 = vsub.s32 0, %v328
      %v330 = vrot.slane %v325, %v329
      %v332 = vadd.f32 %v323, %v330
      %v333 = vadd.f32 %v324, %v330
      %v334 = vpack.c.bf16 %v333, %v332
      %v336 = vunpack.c.l.b16 %v334
      %v337 = vunpack.c.h.b16 %v334
      %v338 = vpack.c.b16 %v336, %v336
      %v339 = vpack.c.b16 %v337, %v337
      %342 = vst.msk [vmem:[#allocation14] sm:$0xf] %vm320, %v338
      %343 = vst.msk [vmem:[#allocation14 + $0x4] sm:$0xf] %vm320, %v339
      %v344 = vld [vmem:[#allocation4] sm:$0xff]
      %v345 = vld [vmem:[#allocation4 + $0x8] sm:$0xff]
      %v346 = vld [vmem:[%s6] sm:$0x1]
      %v348 = vlaneseq
      %v349 = vshrl.u32 %v348, 7
      %v350 = vsub.s32 0, %v349
      %v351 = vrot.slane %v346, %v350
      %v353 = vadd.f32 %v344, %v351
      %v354 = vadd.f32 %v345, %v351
      %v355 = vpack.c.bf16 %v354, %v353
      %v357 = vunpack.c.l.b16 %v355
      %v358 = vunpack.c.h.b16 %v355
      %v359 = vpack.c.b16 %v357, %v357
      %v360 = vpack.c.b16 %v358, %v358
      %363 = vst.msk [vmem:[#allocation16] sm:$0xf] %vm320, %v359
      %364 = vst.msk [vmem:[#allocation16 + $0x4] sm:$0xf] %vm320, %v360
    $region53: #{tpu_custom_call.1} parent=1 // pred_fallthru
      _
    // Predicated region
    $region54: #{tpu_custom_call.1} parent=1 // pred_check
      _
    $region55: #{tpu_custom_call.1} parent=1 // pred_check_branch
      %366 = sbr.rel (0) target = $region57
    $region56: #{tpu_custom_call.1} parent=1 // pred_region
      %s368 = ssub.s32 128, 128
      %369 = vsyncadd [#allocation7], %s368
      %s370 = sshll.u32 [#allocation13], 4
      %s371 = int_to_ptr.vmem [resolvable:$true] %s370
      %376 = dma.vmem_to_hbm [thread:$0]  %s371, 128, %s7, [#allocation7], 64, 64, 4
    $region57: #{tpu_custom_call.1} parent=1 // pred_fallthru
      _
    // Predicated region
    $region58: #{tpu_custom_call.1} parent=1 // pred_check
      _
    $region59: #{tpu_custom_call.1} parent=1 // pred_check_branch
      %378 = sbr.rel (0) target = $region61
    $region60: #{tpu_custom_call.1} parent=1 // pred_region
      %s380 = ssub.s32 128, 128
      %381 = vsyncadd [#allocation15], %s380
      %s382 = sshll.u32 [#allocation14], 4
      %s383 = int_to_ptr.vmem [resolvable:$true] %s382
      %388 = dma.vmem_to_hbm [thread:$0]  %s383, 128, %s8, [#allocation15], 64, 64, 4
    $region61: #{tpu_custom_call.1} parent=1 // pred_fallthru
      _
    // Predicated region
    $region62: #{tpu_custom_call.1} parent=1 // pred_check
      _
    $region63: #{tpu_custom_call.1} parent=1 // pred_check_branch
      %390 = sbr.rel (0) target = $region65
    $region64: #{tpu_custom_call.1} parent=1 // pred_region
      %s392 = ssub.s32 128, 128
      %393 = vsyncadd [#allocation15], %s392
      %s394 = sshll.u32 [#allocation16], 4
      %s395 = int_to_ptr.vmem [resolvable:$true] %s394
      %400 = dma.vmem_to_hbm [thread:$0]  %s395, 128, %s9, [#allocation15], 64, 64, 4
    $region65: #{tpu_custom_call.1} parent=1 // pred_fallthru
      _
    // Predicated region
    $region66: #{tpu_custom_call.1} parent=1 // pred_check
      _
    $region67: #{tpu_custom_call.1} parent=1 // pred_check_branch
      %402 = sbr.rel (0) target = $region69
    $region68: #{tpu_custom_call.1} parent=1 // pred_region
      %403 = dma.done [#allocation7], 128
    $region69: #{tpu_custom_call.1} parent=1 // pred_fallthru
      _
    // Predicated region
    $region70: #{tpu_custom_call.1} parent=1 // pred_check
      _
    $region71: #{tpu_custom_call.1} parent=1 // pred_check_branch
      %405 = sbr.rel (0) target = $region73
    $region72: #{tpu_custom_call.1} parent=1 // pred_region
      %406 = dma.done [#allocation15], 128
    $region73: #{tpu_custom_call.1} parent=1 // pred_fallthru
      _
    // Predicated region
    $region74: #{tpu_custom_call.1} parent=1 // pred_check
      _
    $region75: #{tpu_custom_call.1} parent=1 // pred_check_branch
      %408 = sbr.rel (0) target = $region77
    $region76: #{tpu_custom_call.1} parent=1 // pred_region
      %409 = dma.done [#allocation15], 128
    $region77: #{tpu_custom_call.1} parent=1 // pred_fallthru
      _
    %410 = vsyncpa [#allocation6], 1
    %411 = vsyncpa [#allocation9], 1
    %412 = vsyncpa [#allocation12], 1
    %413 = vsyncpa [#allocation7], 1
    %414 = vsyncpa [#allocation15], 1

</llo_original>
